<compile_context>
chip_gen: v5e
topology: v5e:2x2
jax: 0.10.0
libtpu: 0.0.40
codegen_flags: <defaults>
</compile_context>

<pallas_src>
import math
import functools

import jax
import jax.numpy as jnp
from jax import lax
from jax.experimental import pallas as pl
from jax.experimental.pallas import tpu as pltpu


def _adj_kernel(q_ref, k_ref, w1_ref, w2_ref, mask_ref, o_ref, *, n_obj, d_model, mask_with):
    Bt = q_ref.shape[0]
    Din = q_ref.shape[2]

    # --- node projections: one batch-stacked matmul per weight (MXU), ReLU (VPU) ---
    # Leading-dim merge is tile-aligned when N % 8 == 0 (free-ish reshape).
    q_flat = q_ref[...].reshape(Bt * n_obj, Din)
    k_flat = k_ref[...].reshape(Bt * n_obj, Din)
    # NOTE: 1/sqrt(d_k) has been pre-folded into w1 on the host.
    node_a = jnp.maximum(
        jnp.dot(q_flat, w1_ref[...], preferred_element_type=jnp.float32), 0.0)
    node_b = jnp.maximum(
        jnp.dot(k_flat, w2_ref[...], preferred_element_type=jnp.float32), 0.0)
    node_a = node_a.reshape(Bt, n_obj, d_model)
    node_b = node_b.reshape(Bt, n_obj, d_model)

    # --- adjacency logits: batched contraction on the last dims (no node_b transpose) ---
    adj = lax.dot_general(
        node_a, node_b,
        dimension_numbers=(((2,), (2,)), ((0,), (0,))),
        preferred_element_type=jnp.float32)             # (Bt, Nq, Nk)

    # masked_fill(object_mask == 0, mask_with)
    mask = mask_ref[...]                                # (Bt, Nq, Nk)
    adj = jnp.where(mask == 0.0, jnp.float32(mask_with), adj)

    # softmax over the key axis; reciprocal goes to the EUP slot
    m = jnp.max(adj, axis=-1, keepdims=True)
    e = jnp.exp(adj - m)
    s = jnp.sum(e, axis=-1, keepdims=True)
    adj = e * pl.reciprocal(s, approx=True)

    # re-mask (matches torch's `adj * object_mask`); NaN scrub dropped (mask_with finite).
    adj = adj * mask

    # Pack the Bt batches along the lane axis -> (Nq, Bt*Nk) store slab (lane-denser writes).
    packed = jnp.concatenate([adj[b] for b in range(Bt)], axis=1)
    o_ref[0] = packed.astype(o_ref.dtype)

    # TODO(synk): nn.Dropout(0.1) is identity in eval mode; train-mode dropout not emitted.


def adj_learner_forward(query, key, w1_eff, w2_eff, object_mask,
                        *, d_k, mask_with=-1e10, num_steps=None):
    """query/key: (B, N, Din) f32; w*_eff: (Din, D) f32 (pre-transposed effective weight);
    object_mask: (B, N, N) f32.  Returns adj: (B, 1, N, N) f32 (num_head = 1)."""
    B, N, Din = query.shape
    D = w1_eff.shape[1]

    if num_steps is None:
        # Fully collapse the batch grid for small B (removes per-step pipeline overhead);
        # for larger even B keep 2 'parallel' steps so both TensorCores of a v7x get work.
        num_steps = 2 if (B >= 4 and B % 2 == 0) else 1
    assert B % num_steps == 0
    Bt = B // num_steps

    # Fold the 1/sqrt(d_k) attention scale into W1 (ReLU is positively homogeneous).
    w1_scaled = w1_eff * jnp.float32(1.0 / math.sqrt(d_k))

    kernel = functools.partial(_adj_kernel, n_obj=N, d_model=D, mask_with=mask_with)

    grid_spec = pltpu.PrefetchScalarGridSpec(
        num_scalar_prefetch=0,
        grid=(num_steps,),
        in_specs=[
            pl.BlockSpec((Bt, N, Din), lambda g: (g, 0, 0)),   # query  (Bt batches per step)
            pl.BlockSpec((Bt, N, Din), lambda g: (g, 0, 0)),   # key
            pl.BlockSpec((Din, D),     lambda g: (0, 0)),      # W1_eff * 1/sqrt(d_k) (shared)
            pl.BlockSpec((Din, D),     lambda g: (0, 0)),      # W2_eff (shared)
            pl.BlockSpec((Bt, N, N),   lambda g: (g, 0, 0)),   # object_mask
        ],
        out_specs=pl.BlockSpec((1, N, Bt * N), lambda g: (g, 0, 0)),  # lane-packed adj slab
    )

    packed = pl.pallas_call(
        kernel,
        out_shape=jax.ShapeDtypeStruct((num_steps, N, Bt * N), jnp.float32),
        grid_spec=grid_spec,
        compiler_params=pltpu.CompilerParams(dimension_semantics=("parallel",)),
    )(query, key, w1_scaled, w2_eff, object_mask)

    # Unpack the lane-packed layout back to (B, 1, N, N) — pure layout plumbing in XLA.
    adj = packed.reshape(num_steps, N, Bt, N).transpose(0, 2, 1, 3).reshape(B, N, N)
    return adj[:, None, :, :]


def _weight_norm_effective(v, g):
    # torch weight_norm(dim=None): W = g * v / ||v||_F  (g scalar). At init g = ||v||_F.
    return g * v / jnp.linalg.norm(v)


def _reference(query, key, w1_eff, w2_eff, object_mask, d_k, mask_with=-1e10):
    node_a = jax.nn.relu(query @ w1_eff)          # (B, N, D)
    node_b = jax.nn.relu(key @ w2_eff)            # (B, N, D)
    adj = jnp.einsum("bqd,bkd->bqk", node_a, node_b) / math.sqrt(d_k)
    adj = jnp.where(object_mask == 0.0, mask_with, adj)
    adj = jax.nn.softmax(adj, axis=-1)
    adj = adj * object_mask
    adj = jnp.where(jnp.isnan(adj), 0.0, adj)
    return adj[:, None, :, :]                     # (B, 1, N, N)


if __name__ == "__main__":
    # Small shapes consistent with the module: module_dim = in_dim = 32, num_head = 1.
    B, N, Din = 2, 8, 32
    module_dim = 32
    num_head = 1
    d_k = module_dim // num_head

    key0 = jax.random.PRNGKey(0)
    kq, kk, kw1, kw2, km = jax.random.split(key0, 5)

    query = jax.random.normal(kq, (B, N, Din), dtype=jnp.float32)
    key_t = jax.random.normal(kk, (B, N, Din), dtype=jnp.float32)

    # Deterministic parameter init (PyTorch Linear-style uniform), then weight_norm reparam.
    bound = 1.0 / math.sqrt(Din)
    v1 = jax.random.uniform(kw1, (module_dim, Din), minval=-bound, maxval=bound,
                            dtype=jnp.float32)
    v2 = jax.random.uniform(kw2, (module_dim, Din), minval=-bound, maxval=bound,
                            dtype=jnp.float32)
    g1 = jnp.linalg.norm(v1)
    g2 = jnp.linalg.norm(v2)
    # Effective weights, pre-transposed so the kernel does x @ W_eff  ( == x @ W.T in torch).
    w1_eff = _weight_norm_effective(v1, g1).T     # (Din, module_dim)
    w2_eff = _weight_norm_effective(v2, g2).T     # (Din, module_dim)
    # NOTE: context_layer of AdjLearner is unused in forward(), so it is omitted.

    # Binary object mask (B, Nq, Nk); unsqueeze(1) / head broadcast handled by H=1 output.
    object_mask = (jax.random.uniform(km, (B, N, N)) > 0.2).astype(jnp.float32)

    adj = adj_learner_forward(query, key_t, w1_eff, w2_eff, object_mask, d_k=d_k)
    adj = jax.block_until_ready(adj)

    ref = _reference(query, key_t, w1_eff, w2_eff, object_mask, d_k)
    assert adj.shape == (B, num_head, N, N)
    # Tolerance relaxed to 1e-3: pl.reciprocal(approx=True) carries ~2^-12 relative error.
    assert jnp.allclose(adj, ref, atol=1e-3, rtol=1e-3), "mismatch vs JAX reference"

    print("KERNEL_OK")
</pallas_src>

<mosaic_0001>
module attributes {stable_mosaic.version = 11 : i64} {
  func.func @_adj_kernel(%arg0: i32, %arg1: memref<2x8x32xf32, #tpu.memory_space<vmem>>, %arg2: memref<2x8x32xf32, #tpu.memory_space<vmem>>, %arg3: memref<32x32xf32, #tpu.memory_space<vmem>>, %arg4: memref<32x32xf32, #tpu.memory_space<vmem>>, %arg5: memref<2x8x8xf32, #tpu.memory_space<vmem>>, %arg6: memref<1x8x16xf32, #tpu.memory_space<vmem>>) attributes {dimension_semantics = [#tpu.dimension_semantics<parallel>], iteration_bounds = array<i64: 1>, scalar_prefetch = 0 : i64, scratch_operands = 0 : i64, tpu.core_type = #tpu.core_type<tc>, window_params = [{transform_indices = @transform_0, window_bounds = array<i64: 2, 8, 32>}, {transform_indices = @transform_1, window_bounds = array<i64: 2, 8, 32>}, {pipeline_mode = #tpu.pipeline_mode<synchronous>, transform_indices = @transform_2, window_bounds = array<i64: 32, 32>}, {pipeline_mode = #tpu.pipeline_mode<synchronous>, transform_indices = @transform_3, window_bounds = array<i64: 32, 32>}, {transform_indices = @transform_4, window_bounds = array<i64: 2, 8, 8>}, {transform_indices = @transform_5, window_bounds = array<i64: 1, 8, 16>}]} {
    %c0 = arith.constant 0 : index
    %c0_0 = arith.constant 0 : index
    %c0_1 = arith.constant 0 : index
    %0 = vector.load %arg1[%c0, %c0_0, %c0_1] : memref<2x8x32xf32, #tpu.memory_space<vmem>>, vector<2x8x32xf32>
    %1 = vector.shape_cast %0 : vector<2x8x32xf32> to vector<16x32xf32>
    %c0_2 = arith.constant 0 : index
    %c0_3 = arith.constant 0 : index
    %c0_4 = arith.constant 0 : index
    %2 = vector.load %arg2[%c0_2, %c0_3, %c0_4] : memref<2x8x32xf32, #tpu.memory_space<vmem>>, vector<2x8x32xf32>
    %3 = vector.shape_cast %2 : vector<2x8x32xf32> to vector<16x32xf32>
    %c0_5 = arith.constant 0 : index
    %c0_6 = arith.constant 0 : index
    %4 = vector.load %arg3[%c0_5, %c0_6] : memref<32x32xf32, #tpu.memory_space<vmem>>, vector<32x32xf32>
    %cst = arith.constant dense<0.000000e+00> : vector<16x32xf32>
    %5 = tpu.matmul %1, %4, %cst {dimension_numbers = #tpu.dot_dimension_numbers<[1], [0], [0], [1], [0, 0, 1, 1], [], []>} : vector<16x32xf32>, vector<32x32xf32>, vector<16x32xf32> -> vector<16x32xf32>
    %cst_7 = arith.constant 0.000000e+00 : f32
    %6 = vector.broadcast %cst_7 : f32 to vector<16x32xf32>
    %7 = arith.maximumf %5, %6 : vector<16x32xf32>
    %c0_8 = arith.constant 0 : index
    %c0_9 = arith.constant 0 : index
    %8 = vector.load %arg4[%c0_8, %c0_9] : memref<32x32xf32, #tpu.memory_space<vmem>>, vector<32x32xf32>
    %cst_10 = arith.constant dense<0.000000e+00> : vector<16x32xf32>
    %9 = tpu.matmul %3, %8, %cst_10 {dimension_numbers = #tpu.dot_dimension_numbers<[1], [0], [0], [1], [0, 0, 1, 1], [], []>} : vector<16x32xf32>, vector<32x32xf32>, vector<16x32xf32> -> vector<16x32xf32>
    %cst_11 = arith.constant 0.000000e+00 : f32
    %10 = vector.broadcast %cst_11 : f32 to vector<16x32xf32>
    %11 = arith.maximumf %9, %10 : vector<16x32xf32>
    %12 = vector.shape_cast %7 : vector<16x32xf32> to vector<2x8x32xf32>
    %13 = vector.shape_cast %11 : vector<16x32xf32> to vector<2x8x32xf32>
    %cst_12 = arith.constant dense<0.000000e+00> : vector<2x8x8xf32>
    %14 = tpu.matmul %12, %13, %cst_12 {dimension_numbers = #tpu.dot_dimension_numbers<[2], [2], [1], [1], [0, 0, 0, 1, 1, 1], [0], [0]>} : vector<2x8x32xf32>, vector<2x8x32xf32>, vector<2x8x8xf32> -> vector<2x8x8xf32>
    %c0_13 = arith.constant 0 : index
    %c0_14 = arith.constant 0 : index
    %c0_15 = arith.constant 0 : index
    %15 = vector.load %arg5[%c0_13, %c0_14, %c0_15] : memref<2x8x8xf32, #tpu.memory_space<vmem>>, vector<2x8x8xf32>
    %cst_16 = arith.constant 0.000000e+00 : f32
    %16 = vector.broadcast %cst_16 : f32 to vector<2x8x8xf32>
    %17 = arith.cmpf oeq, %15, %16 : vector<2x8x8xf32>
    %cst_17 = arith.constant -1.000000e+10 : f32
    %18 = vector.broadcast %cst_17 : f32 to vector<2x8x8xf32>
    %19 = arith.select %17, %18, %14 : vector<2x8x8xi1>, vector<2x8x8xf32>
    %cst_18 = arith.constant dense<0xFF800000> : vector<2x8xf32>
    %20 = vector.multi_reduction <maximumf>, %19, %cst_18 [2] : vector<2x8x8xf32> to vector<2x8xf32>
    %21 = vector.shape_cast %20 : vector<2x8xf32> to vector<2x8x1xf32>
    %22 = vector.broadcast %21 : vector<2x8x1xf32> to vector<2x8x8xf32>
    %23 = arith.subf %19, %22 : vector<2x8x8xf32>
    %24 = math.exp %23 : vector<2x8x8xf32>
    %cst_19 = arith.constant dense<0.000000e+00> : vector<2x8xf32>
    %25 = vector.multi_reduction <add>, %24, %cst_19 [2] : vector<2x8x8xf32> to vector<2x8xf32>
    %26 = vector.shape_cast %25 : vector<2x8xf32> to vector<2x8x1xf32>
    %27 = tpu.reciprocal %26 {approx = true} : vector<2x8x1xf32> -> vector<2x8x1xf32>
    %28 = vector.broadcast %27 : vector<2x8x1xf32> to vector<2x8x8xf32>
    %29 = arith.mulf %24, %28 : vector<2x8x8xf32>
    %30 = arith.mulf %29, %15 : vector<2x8x8xf32>
    %31 = vector.extract_strided_slice %30 {offsets = [0, 0, 0], sizes = [1, 8, 8], strides = [1, 1, 1]} : vector<2x8x8xf32> to vector<1x8x8xf32>
    %32 = vector.shape_cast %31 : vector<1x8x8xf32> to vector<8x8xf32>
    %33 = vector.extract_strided_slice %30 {offsets = [1, 0, 0], sizes = [1, 8, 8], strides = [1, 1, 1]} : vector<2x8x8xf32> to vector<1x8x8xf32>
    %34 = vector.shape_cast %33 : vector<1x8x8xf32> to vector<8x8xf32>
    %35 = tpu.concatenate %32, %34 in 1 : vector<8x8xf32>, vector<8x8xf32> -> vector<8x16xf32>
    %c0_20 = arith.constant 0 : index
    %c0_21 = arith.constant 0 : index
    %c0_22 = arith.constant 0 : index
    %36 = vector.load %arg6[%c0_20, %c0_21, %c0_22] : memref<1x8x16xf32, #tpu.memory_space<vmem>>, vector<1x8x16xf32>
    %37 = vector.shape_cast %36 : vector<1x8x16xf32> to vector<8x16xf32>
    %38 = vector.shape_cast %35 : vector<8x16xf32> to vector<1x8x16xf32>
    tpu.vector_store %arg6[%c0_20, %c0_21, %c0_22], %38 {strides = array<i32>} : memref<1x8x16xf32, #tpu.memory_space<vmem>>, vector<1x8x16xf32>,
    return
  }
  func.func @transform_0(%arg0: i32) -> (i32, i32, i32) {
    %c0_i32 = arith.constant 0 : i32
    %c0_i32_0 = arith.constant 0 : i32
    %c0_i32_1 = arith.constant 0 : i32
    return %arg0, %c0_i32, %c0_i32_0 : i32, i32, i32
  }
  func.func @transform_1(%arg0: i32) -> (i32, i32, i32) {
    %c0_i32 = arith.constant 0 : i32
    %c0_i32_0 = arith.constant 0 : i32
    %c0_i32_1 = arith.constant 0 : i32
    return %arg0, %c0_i32, %c0_i32_0 : i32, i32, i32
  }
  func.func @transform_2(%arg0: i32) -> (i32, i32) {
    %c0_i32 = arith.constant 0 : i32
    %c0_i32_0 = arith.constant 0 : i32
    %c0_i32_1 = arith.constant 0 : i32
    return %c0_i32, %c0_i32_0 : i32, i32
  }
  func.func @transform_3(%arg0: i32) -> (i32, i32) {
    %c0_i32 = arith.constant 0 : i32
    %c0_i32_0 = arith.constant 0 : i32
    %c0_i32_1 = arith.constant 0 : i32
    return %c0_i32, %c0_i32_0 : i32, i32
  }
  func.func @transform_4(%arg0: i32) -> (i32, i32, i32) {
    %c0_i32 = arith.constant 0 : i32
    %c0_i32_0 = arith.constant 0 : i32
    %c0_i32_1 = arith.constant 0 : i32
    return %arg0, %c0_i32, %c0_i32_0 : i32, i32, i32
  }
  func.func @transform_5(%arg0: i32) -> (i32, i32, i32) {
    %c0_i32 = arith.constant 0 : i32
    %c0_i32_0 = arith.constant 0 : i32
    %c0_i32_1 = arith.constant 0 : i32
    return %arg0, %c0_i32, %c0_i32_0 : i32, i32, i32
  }
}

</mosaic_0001>

<llo_original>
// kernel: tpu_custom_call.1
$region0: #{tpu_custom_call.1}
  #allocation0 [shape = 'u32[]', space=smem, size = 0x4, offset = 0x4, fixed_abs, tag = 'smem constant byte address 0x4 - core index']
  #allocation1 [shape = 'u32[72,128]{1,0:T(1,128)}', space=vmem, size = 0x9000, scoped, tag = 'internal scratch']
  %s0 = inlined_call_operand.hbm [shape: f32[2,8,32], index: 0, kind: input, shape index: {}]
  %s1 = inlined_call_operand.hbm [shape: f32[2,8,32], index: 1, kind: input, shape index: {}]
  %s2 = inlined_call_operand.hbm [shape: f32[32,32], index: 2, kind: input, shape index: {}]
  %s3 = inlined_call_operand.hbm [shape: f32[32,32], index: 3, kind: input, shape index: {}]
  %s4 = inlined_call_operand.hbm [shape: f32[2,8,8], index: 4, kind: input, shape index: {}]
  %s5 = inlined_call_operand.hbm [shape: f32[1,8,16], index: 5, kind: output, shape index: {}]
  %s6 = sld [smem:[#allocation0]]
  $region50: #{tpu_custom_call.1} parent=0
    _
  %s8 = ssub.s32 1, %s6
  %s9 = scalar_select 0, %s8, %s6
  $region1: #{tpu_custom_call.1} parent=0
    #allocation2 [shape = 'u8[8192]{0}', space=vmem, size = 0x2000, scoped, tag = 'input window, operand 0, single buffered']
    #allocation3 [shape = 's32[1]{0}', space=sflag, size = 0x4, scoped, tag = 'scoped memory for tpu_custom_call.1']
    #allocation4 [shape = 's32[1]{0}', space=sflag, size = 0x4, scoped, tag = 'scoped memory for tpu_custom_call.1']
    #allocation5 [shape = 'u8[8192]{0}', space=vmem, size = 0x2000, scoped, tag = 'input window, operand 1, single buffered']
    #allocation6 [shape = 's32[1]{0}', space=sflag, size = 0x4, scoped, tag = 'scoped memory for tpu_custom_call.1']
    #allocation7 [shape = 'u8[16384]{0}', space=vmem, size = 0x4000, scoped, tag = 'input window, operand 2, single buffered']
    #allocation8 [shape = 'u8[16384]{0}', space=vmem, size = 0x4000, scoped, tag = 'input window, operand 3, single buffered']
    #allocation9 [shape = 's32[1]{0}', space=sflag, size = 0x4, scoped, tag = 'scoped memory for tpu_custom_call.1']
    #allocation10 [shape = 'u8[8192]{0}', space=vmem, size = 0x2000, scoped, tag = 'input window, operand 4, single buffered']
    #allocation11 [shape = 'u8[4096]{0}', space=vmem, size = 0x1000, scoped, tag = 'output window, operand 0, single buffered']
    %10 = vsyncpa [#allocation3], 0
    %11 = vsyncpa [#allocation6], 0
    %12 = vsyncpa [#allocation9], 0
    %13 = vsyncpa [#allocation4], 0
    // Predicated region
    $region2: #{tpu_custom_call.1} parent=1 // pred_check
      _
    $region3: #{tpu_custom_call.1} parent=1 // pred_check_branch
      %15 = sbr.rel (0) target = $region5
    $region4: #{tpu_custom_call.1} parent=1 // pred_region
      %17 = vsyncadd [#allocation3], 0
      %s18 = sshll.u32 %s0, 4
      %s19 = int_to_ptr.hbm [resolvable:$true] %s18
      %s20 = sshll.u32 [#allocation2], 4
      %s21 = int_to_ptr.vmem [resolvable:$true] %s20
      %26 = dma.hbm_to_vmem [thread:$0]  %s19, 256, %s21, [#allocation3], 128, 128, 8
    $region5: #{tpu_custom_call.1} parent=1 // pred_fallthru
      _
    // Predicated region
    $region6: #{tpu_custom_call.1} parent=1 // pred_check
      _
    $region7: #{tpu_custom_call.1} parent=1 // pred_check_branch
      %28 = sbr.rel (0) target = $region9
    $region8: #{tpu_custom_call.1} parent=1 // pred_region
      %30 = vsyncadd [#allocation6], 0
      %s31 = sshll.u32 %s1, 4
      %s32 = int_to_ptr.hbm [resolvable:$true] %s31
      %s33 = sshll.u32 [#allocation5], 4
      %s34 = int_to_ptr.vmem [resolvable:$true] %s33
      %39 = dma.hbm_to_vmem [thread:$0]  %s32, 256, %s34, [#allocation6], 128, 128, 8
    $region9: #{tpu_custom_call.1} parent=1 // pred_fallthru
      _
    // Predicated region
    $region10: #{tpu_custom_call.1} parent=1 // pred_check
      _
    $region11: #{tpu_custom_call.1} parent=1 // pred_check_branch
      %41 = sbr.rel (0) target = $region13
    $region12: #{tpu_custom_call.1} parent=1 // pred_region
      %43 = vsyncadd [#allocation6], 0
      %s44 = sshll.u32 %s2, 4
      %s45 = int_to_ptr.hbm [resolvable:$true] %s44
      %s46 = sshll.u32 [#allocation7], 4
      %s47 = int_to_ptr.vmem [resolvable:$true] %s46
      %52 = dma.hbm_to_vmem [thread:$0]  %s45, 512, %s47, [#allocation6], 128, 128, 8
    $region13: #{tpu_custom_call.1} parent=1 // pred_fallthru
      _
    // Predicated region
    $region14: #{tpu_custom_call.1} parent=1 // pred_check
      _
    $region15: #{tpu_custom_call.1} parent=1 // pred_check_branch
      %54 = sbr.rel (0) target = $region17
    $region16: #{tpu_custom_call.1} parent=1 // pred_region
      %56 = vsyncadd [#allocation9], 0
      %s57 = sshll.u32 %s3, 4
      %s58 = int_to_ptr.hbm [resolvable:$true] %s57
      %s59 = sshll.u32 [#allocation8], 4
      %s60 = int_to_ptr.vmem [resolvable:$true] %s59
      %65 = dma.hbm_to_vmem [thread:$0]  %s58, 512, %s60, [#allocation9], 128, 128, 8
    $region17: #{tpu_custom_call.1} parent=1 // pred_fallthru
      _
    // Predicated region
    $region18: #{tpu_custom_call.1} parent=1 // pred_check
      _
    $region19: #{tpu_custom_call.1} parent=1 // pred_check_branch
      %67 = sbr.rel (0) target = $region21
    $region20: #{tpu_custom_call.1} parent=1 // pred_region
      %69 = vsyncadd [#allocation9], 0
      %s70 = sshll.u32 %s4, 4
      %s71 = int_to_ptr.hbm [resolvable:$true] %s70
      %s72 = sshll.u32 [#allocation10], 4
      %s73 = int_to_ptr.vmem [resolvable:$true] %s72
      %78 = dma.hbm_to_vmem [thread:$0]  %s71, 256, %s73, [#allocation9], 128, 128, 8
    $region21: #{tpu_custom_call.1} parent=1 // pred_fallthru
      _
    // Predicated region
    $region22: #{tpu_custom_call.1} parent=1 // pred_check
      _
    $region23: #{tpu_custom_call.1} parent=1 // pred_check_branch
      %80 = sbr.rel (0) target = $region25
    $region24: #{tpu_custom_call.1} parent=1 // pred_region
      %82 = dma.done [#allocation3], 256
    $region25: #{tpu_custom_call.1} parent=1 // pred_fallthru
      _
    // Predicated region
    $region26: #{tpu_custom_call.1} parent=1 // pred_check
      _
    $region27: #{tpu_custom_call.1} parent=1 // pred_check_branch
      %84 = sbr.rel (0) target = $region29
    $region28: #{tpu_custom_call.1} parent=1 // pred_region
      %86 = dma.done [#allocation6], 256
    $region29: #{tpu_custom_call.1} parent=1 // pred_fallthru
      _
    // Predicated region
    $region30: #{tpu_custom_call.1} parent=1 // pred_check
      _
    $region31: #{tpu_custom_call.1} parent=1 // pred_check_branch
      %88 = sbr.rel (0) target = $region33
    $region32: #{tpu_custom_call.1} parent=1 // pred_region
      %90 = dma.done [#allocation6], 512
    $region33: #{tpu_custom_call.1} parent=1 // pred_fallthru
      _
    // Predicated region
    $region34: #{tpu_custom_call.1} parent=1 // pred_check
      _
    $region35: #{tpu_custom_call.1} parent=1 // pred_check_branch
      %92 = sbr.rel (0) target = $region37
    $region36: #{tpu_custom_call.1} parent=1 // pred_region
      %94 = dma.done [#allocation9], 512
    $region37: #{tpu_custom_call.1} parent=1 // pred_fallthru
      _
    // Predicated region
    $region38: #{tpu_custom_call.1} parent=1 // pred_check
      _
    $region39: #{tpu_custom_call.1} parent=1 // pred_check_branch
      %96 = sbr.rel (0) target = $region41
    $region40: #{tpu_custom_call.1} parent=1 // pred_region
      %98 = dma.done [#allocation9], 256
    $region41: #{tpu_custom_call.1} parent=1 // pred_fallthru
      _
    %v99 = vld [vmem:[#allocation2] sm:$0xff]
    %v100 = vld [vmem:[#allocation2 + $0x8] sm:$0xff]
    %v101 = vld [vmem:[#allocation5] sm:$0xff]
    %v102 = vld [vmem:[#allocation5 + $0x8] sm:$0xff]
    %v103 = vld [vmem:[#allocation7] sm:$0xff]
    %v104 = vld [vmem:[#allocation7 + $0x8] sm:$0xff]
    %v105 = vld [vmem:[#allocation7 + $0x10] sm:$0xff]
    %v106 = vld [vmem:[#allocation7 + $0x18] sm:$0xff]
    %vm107 = vcmask 261120
    %v109 = vsel %vm107, %v99, 0
    %v112 = vsel %vm107, %v100, 0
    %114 = vmatpush.msra.mxu0 0.0
    %115 = vmatpush.msra.mxu0 0.0
    %116 = vmatpush.msra.mxu0 0.0
    %117 = vmatpush.msra.mxu0 0.0
    %118 = vmatpush.msra.mxu0 0.0
    %119 = vmatpush.msra.mxu0 0.0
    %120 = vmatpush.msra.mxu0 0.0
    %121 = vmatpush.msra.mxu0 0.0
    %122 = vmatpush.msra.mxu0 0.0
    %123 = vmatpush.msra.mxu0 0.0
    %124 = vmatpush.msra.mxu0 0.0
    %125 = vmatpush.msra.mxu0 0.0
    %126 = vmatpush.msra.mxu0 %v106
    %127 = vmatpush.msra.mxu0 %v105
    %128 = vmatpush.msra.mxu0 %v104
    %129 = vmatpush.msra.mxu0 %v103
    %130 = vmatmul.f32.gmra.mxu0 %v109
    %v131 = vpop.f32.mrf.mxu0
    %v132 = vadd.f32 0.0, %v131
    %133 = vmatmul.f32.gmra.mxu0 %v112
    %v134 = vpop.f32.mrf.mxu0
    %v135 = vadd.f32 0.0, %v134
    %136 = vdwg.mxu0
    %v137 = vmax.f32 %v132, 0.0
    %v138 = vmax.f32 %v135, 0.0
    %v139 = vld [vmem:[#allocation8] sm:$0xff]
    %v140 = vld [vmem:[#allocation8 + $0x8] sm:$0xff]
    %v141 = vld [vmem:[#allocation8 + $0x10] sm:$0xff]
    %v142 = vld [vmem:[#allocation8 + $0x18] sm:$0xff]
    %v144 = vsel %vm107, %v101, 0
    %v147 = vsel %vm107, %v102, 0
    %149 = vmatpush.msra.mxu0 0.0
    %150 = vmatpush.msra.mxu0 0.0
    %151 = vmatpush.msra.mxu0 0.0
    %152 = vmatpush.msra.mxu0 0.0
    %153 = vmatpush.msra.mxu0 0.0
    %154 = vmatpush.msra.mxu0 0.0
    %155 = vmatpush.msra.mxu0 0.0
    %156 = vmatpush.msra.mxu0 0.0
    %157 = vmatpush.msra.mxu0 0.0
    %158 = vmatpush.msra.mxu0 0.0
    %159 = vmatpush.msra.mxu0 0.0
    %160 = vmatpush.msra.mxu0 0.0
    %161 = vmatpush.msra.mxu0 %v142
    %162 = vmatpush.msra.mxu0 %v141
    %163 = vmatpush.msra.mxu0 %v140
    %164 = vmatpush.msra.mxu0 %v139
    %165 = vmatmul.f32.gmra.mxu0 %v144
    %v166 = vpop.f32.mrf.mxu0
    %v167 = vadd.f32 0.0, %v166
    %168 = vmatmul.f32.gmra.mxu0 %v147
    %v169 = vpop.f32.mrf.mxu0
    %v170 = vadd.f32 0.0, %v169
    %171 = vdwg.mxu0
    %v172 = vmax.f32 %v167, 0.0
    %v173 = vmax.f32 %v170, 0.0
    %v175 = vsel %vm107, %v137, 0
    %v178 = vsel %vm107, %v172, 0
    %180 = vmatpush.xpose.msra.mxu0 0.0
    %181 = vmatpush.xpose.msra.mxu0 0.0
    %182 = vmatpush.xpose.msra.mxu0 0.0
    %183 = vmatpush.xpose.msra.mxu0 0.0
    %184 = vmatpush.xpose.msra.mxu0 0.0
    %185 = vmatpush.xpose.msra.mxu0 0.0
    %186 = vmatpush.xpose.msra.mxu0 0.0
    %187 = vmatpush.xpose.msra.mxu0 0.0
    %188 = vmatpush.xpose.msra.mxu0 0.0
    %189 = vmatpush.xpose.msra.mxu0 0.0
    %190 = vmatpush.xpose.msra.mxu0 0.0
    %191 = vmatpush.xpose.msra.mxu0 0.0
    %192 = vmatpush.xpose.msra.mxu0 0.0
    %193 = vmatpush.xpose.msra.mxu0 0.0
    %194 = vmatpush.xpose.msra.mxu0 0.0
    %195 = vmatpush.xpose.msra.mxu0 %v178
    %196 = vmatmul.f32.gmra.mxu0 %v175
    %v197 = vpop.f32.mrf.mxu0
    %v198 = vadd.f32 0.0, %v197
    %199 = vdwg.mxu0
    %v201 = vsel %vm107, %v138, 0
    %v204 = vsel %vm107, %v173, 0
    %206 = vmatpush.xpose.msra.mxu0 0.0
    %207 = vmatpush.xpose.msra.mxu0 0.0
    %208 = vmatpush.xpose.msra.mxu0 0.0
    %209 = vmatpush.xpose.msra.mxu0 0.0
    %210 = vmatpush.xpose.msra.mxu0 0.0
    %211 = vmatpush.xpose.msra.mxu0 0.0
    %212 = vmatpush.xpose.msra.mxu0 0.0
    %213 = vmatpush.xpose.msra.mxu0 0.0
    %214 = vmatpush.xpose.msra.mxu0 0.0
    %215 = vmatpush.xpose.msra.mxu0 0.0
    %216 = vmatpush.xpose.msra.mxu0 0.0
    %217 = vmatpush.xpose.msra.mxu0 0.0
    %218 = vmatpush.xpose.msra.mxu0 0.0
    %219 = vmatpush.xpose.msra.mxu0 0.0
    %220 = vmatpush.xpose.msra.mxu0 0.0
    %221 = vmatpush.xpose.msra.mxu0 %v204
    %222 = vmatmul.f32.gmra.mxu0 %v201
    %v223 = vpop.f32.mrf.mxu0
    %v224 = vadd.f32 0.0, %v223
    %225 = vdwg.mxu0
    %v226 = vld [vmem:[#allocation10] sm:$0xff]
    %v227 = vld [vmem:[#allocation10 + $0x8] sm:$0xff]
    %vm228 = vcmp.eq.f32.partialorder %v226, 0.0
    %vm229 = vcmp.eq.f32.partialorder %v227, 0.0
    %v230 = vsel %vm228, -1e+10, %v198
    %v231 = vsel %vm229, -1e+10, %v224
    %vm232 = vcmask 64512
    %v233 = vsel %vm232, %v230, -inf
    %234 = vmax.xlane.f32.xlu0 %v233
    %v235 = vpop.xlane.xlu0 %234
    %v236 = vsel %vm232, %v231, -inf
    %237 = vmax.xlane.f32.xlu0 %v236
    %v238 = vpop.xlane.xlu0 %237
    %v239 = vsub.f32 %v230, %v235
    %v240 = vsub.f32 %v231, %v238
    %v241 = vmul.f32 %v239, 1.442695
    %v242 = vpow.pop %v241
    %v243 = vmul.f32 %v240, 1.442695
    %v244 = vpow.pop %v243
    %v245 = vsel %vm232, %v242, 0.0
    %246 = vadd.xlane.f32.xlu0 %v245
    %v247 = vpop.xlane.xlu0 %246
    %v248 = vsel %vm232, %v244, 0.0
    %249 = vadd.xlane.f32.xlu0 %v248
    %v250 = vpop.xlane.xlu0 %249
    %v251 = vrcp.pop %v247
    %v252 = vrcp.pop %v250
    %v253 = vmul.f32 %v242, %v251
    %v254 = vmul.f32 %v244, %v252
    %v255 = vmul.f32 %v253, %v226
    %v256 = vmul.f32 %v254, %v227
    %258 = vrot.lane.b32.xlu0 %v256, 8
    %v259 = vpop.permute.xlu0 %258
    %v261 = vsel %vm232, %v255, %v259
    %vm262 = vcmask 130048
    %263 = vst.msk [vmem:[#allocation11] sm:$0xff] %vm262, %v261
    // Predicated region
    $region42: #{tpu_custom_call.1} parent=1 // pred_check
      _
    $region43: #{tpu_custom_call.1} parent=1 // pred_check_branch
      %265 = sbr.rel (0) target = $region45
    $region44: #{tpu_custom_call.1} parent=1 // pred_region
      %267 = vsyncadd [#allocation4], 0
      %s269 = sshll.u32 [#allocation11], 4
      %s270 = int_to_ptr.vmem [resolvable:$true] %s269
      %s271 = sshll.u32 %s5, 4
      %s272 = int_to_ptr.hbm [resolvable:$true] %s271
      %274 = dma.vmem_to_hbm [thread:$0]  %s270, 128, %s272, [#allocation4]
    $region45: #{tpu_custom_call.1} parent=1 // pred_fallthru
      _
    // Predicated region
    $region46: #{tpu_custom_call.1} parent=1 // pred_check
      _
    $region47: #{tpu_custom_call.1} parent=1 // pred_check_branch
      %276 = sbr.rel (0) target = $region49
    $region48: #{tpu_custom_call.1} parent=1 // pred_region
      %278 = dma.done [#allocation4], 128
    $region49: #{tpu_custom_call.1} parent=1 // pred_fallthru
      _
    %279 = vsyncpa [#allocation3], 1
    %280 = vsyncpa [#allocation6], 1
    %281 = vsyncpa [#allocation9], 1
    %282 = vsyncpa [#allocation4], 1

</llo_original>
